<compile_context>
chip_gen: v5e
topology: v5e:2x2
jax: 0.10.0
libtpu: 0.0.40
codegen_flags: <defaults>
</compile_context>

<pallas_src>
import functools

import jax
import jax.numpy as jnp
from jax.experimental import pallas as pl
from jax.experimental.pallas import tpu as pltpu

H1 = 256  # fcs1 width
H2 = 128  # fcs2 / fca1 / fc2 width


def critic_kernel(s_ref, a_ref,
                  ws1_ref, bs1_ref,
                  wa1_ref, ba1_ref,
                  ws2_ref, bs2_ref,
                  w2_ref, b2_ref,
                  w3_ref, b3_ref,
                  out_ref, *, split_fc2):
    # In-kernel bf16 cast of the batch tiles (inputs stay f32 in HBM).
    s = s_ref[...].astype(jnp.bfloat16)
    a = a_ref[...].astype(jnp.bfloat16)

    # Entry layers: two exact-sized MXU matmuls, f32 accumulation.
    s1 = jnp.maximum(
        jnp.dot(s, ws1_ref[...], preferred_element_type=jnp.float32)
        + bs1_ref[...], 0.0)                                   # [TB, 256] f32
    a1 = jnp.maximum(
        jnp.dot(a, wa1_ref[...], preferred_element_type=jnp.float32)
        + ba1_ref[...], 0.0)                                   # [TB, 128] f32

    # s2 = relu(fcs2(s1))
    s2 = jnp.maximum(
        jnp.dot(s1.astype(jnp.bfloat16), ws2_ref[...],
                preferred_element_type=jnp.float32) + bs2_ref[...], 0.0)

    s2b = s2.astype(jnp.bfloat16)
    a1b = a1.astype(jnp.bfloat16)
    if split_fc2:
        # v5e path: MXU is 128 deep, so K=256 needs two weight loads anyway.
        # Two K=128 dots + a VPU add — same MXU cost, no lane-concat copy.
        h_pre = (jnp.dot(s2b, w2_ref[:H2, :],
                         preferred_element_type=jnp.float32)
                 + jnp.dot(a1b, w2_ref[H2:, :],
                           preferred_element_type=jnp.float32))
    else:
        # v6e/v7x path: single full-width K=256 MXU pass; halves cast to bf16
        # before the concat so only one [TB, 256] bf16 temp is materialized.
        hs = jnp.concatenate([s2b, a1b], axis=-1)              # [TB, 256] bf16
        h_pre = jnp.dot(hs, w2_ref[...], preferred_element_type=jnp.float32)
    h = jnp.maximum(h_pre + b2_ref[...], 0.0)                  # [TB, 128] f32

    # fc3: N=1 output -> VPU multiply + lane reduction (off the MXU).
    out_ref[...] = (jnp.sum(h * w3_ref[...], axis=-1, keepdims=True)
                    + b3_ref[...])


def _round_up(x, m):
    return (x + m - 1) // m * m


def pack_critic_params(p):
    """Cast/reshape params ONCE (at init / on param update), not per forward."""
    return (p["ws1"].astype(jnp.bfloat16), p["bs1"],
            p["wa1"].astype(jnp.bfloat16), p["ba1"],
            p["ws2"].astype(jnp.bfloat16), p["bs2"],
            p["w2"].astype(jnp.bfloat16), p["b2"],
            p["w3"].reshape(1, H2).astype(jnp.float32), p["b3"])


def _default_split_fc2():
    # Split fc2 into two K=128 matmuls on v5e (128-deep MXU); keep the single
    # K=256 pass on v6e/v7x.
    try:
        return "v5" in jax.devices()[0].device_kind.lower()
    except Exception:
        return False


def critic_forward(state, action, packed_params, *, block_batch=1024,
                   split_fc2=None):
    if split_fc2 is None:
        split_fc2 = _default_split_fc2()

    n, sd = state.shape
    ad = action.shape[1]

    # Batch tile: multiple of 16 (bf16 sublane packing).  Large tiles amortize
    # the ~0.35us fixed per-grid-step overhead; the cdiv(n, 2) cap keeps >=2
    # roughly balanced steps for large n so v7x can shard both TensorCores.
    tb = min(block_batch,
             _round_up(n, 16),
             max(16, _round_up(pl.cdiv(n, 2), 16)))
    n_pad = _round_up(n, tb)
    grid = (n_pad // tb,)

    if n_pad != n:
        # Padded rows flow through the net (biases make them nonzero) and are
        # discarded by the out[:n] slice below.
        state = jnp.pad(state, ((0, n_pad - n), (0, 0)))
        action = jnp.pad(action, ((0, n_pad - n), (0, 0)))

    (ws1, bs1, wa1, ba1, ws2, bs2, w2, b2, w3, b3) = packed_params

    def const_spec(arr):
        # Resident block: whole array, block index never changes -> DMA'd once.
        return pl.BlockSpec(arr.shape, lambda i: (0, 0))

    # fcs1 + fca1 + fcs2 + fc2 + fc3 MACs, x2 for flops.
    flops = 2 * n_pad * (sd * H1 + ad * H2 + H1 * H2 + H1 * H2 + H2)
    bytes_accessed = (state.size * 4 + action.size * 4 + n_pad * 4
                      + sum(a.size * a.dtype.itemsize for a in packed_params))

    out = pl.pallas_call(
        functools.partial(critic_kernel, split_fc2=split_fc2),
        out_shape=jax.ShapeDtypeStruct((n_pad, 1), jnp.float32),
        grid_spec=pltpu.PrefetchScalarGridSpec(
            num_scalar_prefetch=0,
            grid=grid,
            in_specs=[
                pl.BlockSpec((tb, sd), lambda i: (i, 0)),    # state (batch)
                pl.BlockSpec((tb, ad), lambda i: (i, 0)),    # action (batch)
                const_spec(ws1), const_spec(bs1),
                const_spec(wa1), const_spec(ba1),
                const_spec(ws2), const_spec(bs2),
                const_spec(w2), const_spec(b2),
                const_spec(w3), const_spec(b3),
            ],
            out_specs=pl.BlockSpec((tb, 1), lambda i: (i, 0)),
        ),
        compiler_params=pltpu.CompilerParams(
            dimension_semantics=("parallel",)),
        cost_estimate=pl.CostEstimate(
            flops=flops, transcendentals=0, bytes_accessed=bytes_accessed),
    )(state, action, ws1, bs1, wa1, ba1, ws2, bs2, w2, b2, w3, b3)
    return out[:n]


def xavier_uniform(key, fan_in, fan_out):
    # matches nn.init.xavier_uniform_ (gain=1); stored [in, out]
    bound = (6.0 / (fan_in + fan_out)) ** 0.5
    return jax.random.uniform(key, (fan_in, fan_out), jnp.float32,
                              minval=-bound, maxval=bound)


def init_critic_params(key, state_dim, action_dim):
    k1, k2, k3, k4, k5 = jax.random.split(key, 5)
    bias = lambda out: jnp.full((1, out), 0.01, jnp.float32)  # bias.fill_(0.01)
    return {
        "ws1": xavier_uniform(k1, state_dim, 256),  "bs1": bias(256),
        "ws2": xavier_uniform(k2, 256, 128),        "bs2": bias(128),
        "wa1": xavier_uniform(k3, action_dim, 128), "ba1": bias(128),
        "w2":  xavier_uniform(k4, 256, 128),        "b2":  bias(128),
        "w3":  xavier_uniform(k5, 128, 1),          "b3":  bias(1),
    }


def critic_reference(state, action, p):
    # Pure-JAX f32 reference mirroring the PyTorch forward exactly.
    relu = lambda x: jnp.maximum(x, 0.0)
    s1 = relu(state @ p["ws1"] + p["bs1"])
    s2 = relu(s1 @ p["ws2"] + p["bs2"])
    a1 = relu(action @ p["wa1"] + p["ba1"])
    cat = jnp.concatenate([s2, a1], axis=1)
    h = relu(cat @ p["w2"] + p["b2"])
    return h @ p["w3"] + p["b3"]


if __name__ == "__main__":
    state_dim, action_dim, batch = 16, 4, 8
    key = jax.random.PRNGKey(0)
    kp, ks, ka = jax.random.split(key, 3)

    params = init_critic_params(kp, state_dim, action_dim)
    packed = pack_critic_params(params)   # pack ONCE, outside the forward path

    state = jax.random.normal(ks, (batch, state_dim), jnp.float32)
    action = jax.random.normal(ka, (batch, action_dim), jnp.float32)

    q_ref = critic_reference(state, action, params)

    # Default (auto-detected) fc2 path.
    q = jax.block_until_ready(critic_forward(state, action, packed))
    assert q.shape == (batch, 1)
    # bf16 MXU operands with f32 accumulation -> loosened tolerance vs f32 ref.
    assert jnp.allclose(q, q_ref, atol=5e-2, rtol=5e-2), (
        f"max abs err {float(jnp.max(jnp.abs(q - q_ref)))}")

    # Also exercise the alternate fc2 path (v5e-style split) for correctness.
    q_split = jax.block_until_ready(
        critic_forward(state, action, packed, split_fc2=True))
    assert jnp.allclose(q_split, q_ref, atol=5e-2, rtol=5e-2), (
        f"max abs err {float(jnp.max(jnp.abs(q_split - q_ref)))}")

    print("KERNEL_OK")
</pallas_src>

<mosaic_0001>
module attributes {stable_mosaic.version = 11 : i64} {
  func.func @critic_kernel(%arg0: i32, %arg1: memref<16x16xf32, #tpu.memory_space<vmem>>, %arg2: memref<16x4xf32, #tpu.memory_space<vmem>>, %arg3: memref<16x256xbf16, #tpu.memory_space<vmem>>, %arg4: memref<1x256xf32, #tpu.memory_space<vmem>>, %arg5: memref<4x128xbf16, #tpu.memory_space<vmem>>, %arg6: memref<1x128xf32, #tpu.memory_space<vmem>>, %arg7: memref<256x128xbf16, #tpu.memory_space<vmem>>, %arg8: memref<1x128xf32, #tpu.memory_space<vmem>>, %arg9: memref<256x128xbf16, #tpu.memory_space<vmem>>, %arg10: memref<1x128xf32, #tpu.memory_space<vmem>>, %arg11: memref<1x128xf32, #tpu.memory_space<vmem>>, %arg12: memref<1x1xf32, #tpu.memory_space<vmem>>, %arg13: memref<16x1xf32, #tpu.memory_space<vmem>>) attributes {dimension_semantics = [#tpu.dimension_semantics<parallel>], iteration_bounds = array<i64: 1>, scalar_prefetch = 0 : i64, scratch_operands = 0 : i64, tpu.core_type = #tpu.core_type<tc>, window_params = [{transform_indices = @transform_0, window_bounds = array<i64: 16, 16>}, {transform_indices = @transform_1, window_bounds = array<i64: 16, 4>}, {pipeline_mode = #tpu.pipeline_mode<synchronous>, transform_indices = @transform_2, window_bounds = array<i64: 16, 256>}, {pipeline_mode = #tpu.pipeline_mode<synchronous>, transform_indices = @transform_3, window_bounds = array<i64: 1, 256>}, {pipeline_mode = #tpu.pipeline_mode<synchronous>, transform_indices = @transform_4, window_bounds = array<i64: 4, 128>}, {pipeline_mode = #tpu.pipeline_mode<synchronous>, transform_indices = @transform_5, window_bounds = array<i64: 1, 128>}, {pipeline_mode = #tpu.pipeline_mode<synchronous>, transform_indices = @transform_6, window_bounds = array<i64: 256, 128>}, {pipeline_mode = #tpu.pipeline_mode<synchronous>, transform_indices = @transform_7, window_bounds = array<i64: 1, 128>}, {pipeline_mode = #tpu.pipeline_mode<synchronous>, transform_indices = @transform_8, window_bounds = array<i64: 256, 128>}, {pipeline_mode = #tpu.pipeline_mode<synchronous>, transform_indices = @transform_9, window_bounds = array<i64: 1, 128>}, {pipeline_mode = #tpu.pipeline_mode<synchronous>, transform_indices = @transform_10, window_bounds = array<i64: 1, 128>}, {pipeline_mode = #tpu.pipeline_mode<synchronous>, transform_indices = @transform_11, window_bounds = array<i64: 1, 1>}, {transform_indices = @transform_12, window_bounds = array<i64: 16, 1>}]} {
    %c0 = arith.constant 0 : index
    %c0_0 = arith.constant 0 : index
    %0 = vector.load %arg1[%c0, %c0_0] : memref<16x16xf32, #tpu.memory_space<vmem>>, vector<16x16xf32>
    %1 = arith.truncf %0 : vector<16x16xf32> to vector<16x16xbf16>
    %c0_1 = arith.constant 0 : index
    %c0_2 = arith.constant 0 : index
    %2 = vector.load %arg2[%c0_1, %c0_2] : memref<16x4xf32, #tpu.memory_space<vmem>>, vector<16x4xf32>
    %3 = arith.truncf %2 : vector<16x4xf32> to vector<16x4xbf16>
    %c0_3 = arith.constant 0 : index
    %c0_4 = arith.constant 0 : index
    %4 = vector.load %arg3[%c0_3, %c0_4] : memref<16x256xbf16, #tpu.memory_space<vmem>>, vector<16x256xbf16>
    %cst = arith.constant dense<0.000000e+00> : vector<16x256xf32>
    %5 = tpu.matmul %1, %4, %cst {dimension_numbers = #tpu.dot_dimension_numbers<[1], [0], [0], [1], [0, 0, 1, 1], [], []>} : vector<16x16xbf16>, vector<16x256xbf16>, vector<16x256xf32> -> vector<16x256xf32>
    %c0_5 = arith.constant 0 : index
    %c0_6 = arith.constant 0 : index
    %6 = vector.load %arg4[%c0_5, %c0_6] : memref<1x256xf32, #tpu.memory_space<vmem>>, vector<1x256xf32>
    %7 = vector.broadcast %6 : vector<1x256xf32> to vector<16x256xf32>
    %8 = arith.addf %5, %7 : vector<16x256xf32>
    %cst_7 = arith.constant 0.000000e+00 : f32
    %9 = vector.broadcast %cst_7 : f32 to vector<16x256xf32>
    %10 = arith.maximumf %8, %9 : vector<16x256xf32>
    %c0_8 = arith.constant 0 : index
    %c0_9 = arith.constant 0 : index
    %11 = vector.load %arg5[%c0_8, %c0_9] : memref<4x128xbf16, #tpu.memory_space<vmem>>, vector<4x128xbf16>
    %cst_10 = arith.constant dense<0.000000e+00> : vector<16x128xf32>
    %12 = tpu.matmul %3, %11, %cst_10 {dimension_numbers = #tpu.dot_dimension_numbers<[1], [0], [0], [1], [0, 0, 1, 1], [], []>} : vector<16x4xbf16>, vector<4x128xbf16>, vector<16x128xf32> -> vector<16x128xf32>
    %c0_11 = arith.constant 0 : index
    %c0_12 = arith.constant 0 : index
    %13 = vector.load %arg6[%c0_11, %c0_12] : memref<1x128xf32, #tpu.memory_space<vmem>>, vector<1x128xf32>
    %14 = vector.broadcast %13 : vector<1x128xf32> to vector<16x128xf32>
    %15 = arith.addf %12, %14 : vector<16x128xf32>
    %cst_13 = arith.constant 0.000000e+00 : f32
    %16 = vector.broadcast %cst_13 : f32 to vector<16x128xf32>
    %17 = arith.maximumf %15, %16 : vector<16x128xf32>
    %18 = arith.truncf %10 : vector<16x256xf32> to vector<16x256xbf16>
    %c0_14 = arith.constant 0 : index
    %c0_15 = arith.constant 0 : index
    %19 = vector.load %arg7[%c0_14, %c0_15] : memref<256x128xbf16, #tpu.memory_space<vmem>>, vector<256x128xbf16>
    %cst_16 = arith.constant dense<0.000000e+00> : vector<16x128xf32>
    %20 = tpu.matmul %18, %19, %cst_16 {dimension_numbers = #tpu.dot_dimension_numbers<[1], [0], [0], [1], [0, 0, 1, 1], [], []>} : vector<16x256xbf16>, vector<256x128xbf16>, vector<16x128xf32> -> vector<16x128xf32>
    %c0_17 = arith.constant 0 : index
    %c0_18 = arith.constant 0 : index
    %21 = vector.load %arg8[%c0_17, %c0_18] : memref<1x128xf32, #tpu.memory_space<vmem>>, vector<1x128xf32>
    %22 = vector.broadcast %21 : vector<1x128xf32> to vector<16x128xf32>
    %23 = arith.addf %20, %22 : vector<16x128xf32>
    %cst_19 = arith.constant 0.000000e+00 : f32
    %24 = vector.broadcast %cst_19 : f32 to vector<16x128xf32>
    %25 = arith.maximumf %23, %24 : vector<16x128xf32>
    %26 = arith.truncf %25 : vector<16x128xf32> to vector<16x128xbf16>
    %27 = arith.truncf %17 : vector<16x128xf32> to vector<16x128xbf16>
    %28 = tpu.concatenate %26, %27 in 1 : vector<16x128xbf16>, vector<16x128xbf16> -> vector<16x256xbf16>
    %c0_20 = arith.constant 0 : index
    %c0_21 = arith.constant 0 : index
    %29 = vector.load %arg9[%c0_20, %c0_21] : memref<256x128xbf16, #tpu.memory_space<vmem>>, vector<256x128xbf16>
    %cst_22 = arith.constant dense<0.000000e+00> : vector<16x128xf32>
    %30 = tpu.matmul %28, %29, %cst_22 {dimension_numbers = #tpu.dot_dimension_numbers<[1], [0], [0], [1], [0, 0, 1, 1], [], []>} : vector<16x256xbf16>, vector<256x128xbf16>, vector<16x128xf32> -> vector<16x128xf32>
    %c0_23 = arith.constant 0 : index
    %c0_24 = arith.constant 0 : index
    %31 = vector.load %arg10[%c0_23, %c0_24] : memref<1x128xf32, #tpu.memory_space<vmem>>, vector<1x128xf32>
    %32 = vector.broadcast %31 : vector<1x128xf32> to vector<16x128xf32>
    %33 = arith.addf %30, %32 : vector<16x128xf32>
    %cst_25 = arith.constant 0.000000e+00 : f32
    %34 = vector.broadcast %cst_25 : f32 to vector<16x128xf32>
    %35 = arith.maximumf %33, %34 : vector<16x128xf32>
    %c0_26 = arith.constant 0 : index
    %c0_27 = arith.constant 0 : index
    %36 = vector.load %arg11[%c0_26, %c0_27] : memref<1x128xf32, #tpu.memory_space<vmem>>, vector<1x128xf32>
    %37 = vector.broadcast %36 : vector<1x128xf32> to vector<16x128xf32>
    %38 = arith.mulf %35, %37 : vector<16x128xf32>
    %cst_28 = arith.constant dense<0.000000e+00> : vector<16xf32>
    %39 = vector.multi_reduction <add>, %38, %cst_28 [1] : vector<16x128xf32> to vector<16xf32>
    %40 = vector.shape_cast %39 : vector<16xf32> to vector<16x1xf32>
    %c0_29 = arith.constant 0 : index
    %c0_30 = arith.constant 0 : index
    %41 = vector.load %arg12[%c0_29, %c0_30] : memref<1x1xf32, #tpu.memory_space<vmem>>, vector<1x1xf32>
    %42 = vector.broadcast %41 : vector<1x1xf32> to vector<16x1xf32>
    %43 = arith.addf %40, %42 : vector<16x1xf32>
    %c0_31 = arith.constant 0 : index
    %c0_32 = arith.constant 0 : index
    %44 = vector.load %arg13[%c0_31, %c0_32] : memref<16x1xf32, #tpu.memory_space<vmem>>, vector<16x1xf32>
    tpu.vector_store %arg13[%c0_31, %c0_32], %43 {strides = array<i32>} : memref<16x1xf32, #tpu.memory_space<vmem>>, vector<16x1xf32>,
    return
  }
  func.func @transform_0(%arg0: i32) -> (i32, i32) {
    %c0_i32 = arith.constant 0 : i32
    %c0_i32_0 = arith.constant 0 : i32
    return %arg0, %c0_i32 : i32, i32
  }
  func.func @transform_1(%arg0: i32) -> (i32, i32) {
    %c0_i32 = arith.constant 0 : i32
    %c0_i32_0 = arith.constant 0 : i32
    return %arg0, %c0_i32 : i32, i32
  }
  func.func @transform_2(%arg0: i32) -> (i32, i32) {
    %c0_i32 = arith.constant 0 : i32
    %c0_i32_0 = arith.constant 0 : i32
    %c0_i32_1 = arith.constant 0 : i32
    return %c0_i32, %c0_i32_0 : i32, i32
  }
  func.func @transform_3(%arg0: i32) -> (i32, i32) {
    %c0_i32 = arith.constant 0 : i32
    %c0_i32_0 = arith.constant 0 : i32
    %c0_i32_1 = arith.constant 0 : i32
    return %c0_i32, %c0_i32_0 : i32, i32
  }
  func.func @transform_4(%arg0: i32) -> (i32, i32) {
    %c0_i32 = arith.constant 0 : i32
    %c0_i32_0 = arith.constant 0 : i32
    %c0_i32_1 = arith.constant 0 : i32
    return %c0_i32, %c0_i32_0 : i32, i32
  }
  func.func @transform_5(%arg0: i32) -> (i32, i32) {
    %c0_i32 = arith.constant 0 : i32
    %c0_i32_0 = arith.constant 0 : i32
    %c0_i32_1 = arith.constant 0 : i32
    return %c0_i32, %c0_i32_0 : i32, i32
  }
  func.func @transform_6(%arg0: i32) -> (i32, i32) {
    %c0_i32 = arith.constant 0 : i32
    %c0_i32_0 = arith.constant 0 : i32
    %c0_i32_1 = arith.constant 0 : i32
    return %c0_i32, %c0_i32_0 : i32, i32
  }
  func.func @transform_7(%arg0: i32) -> (i32, i32) {
    %c0_i32 = arith.constant 0 : i32
    %c0_i32_0 = arith.constant 0 : i32
    %c0_i32_1 = arith.constant 0 : i32
    return %c0_i32, %c0_i32_0 : i32, i32
  }
  func.func @transform_8(%arg0: i32) -> (i32, i32) {
    %c0_i32 = arith.constant 0 : i32
    %c0_i32_0 = arith.constant 0 : i32
    %c0_i32_1 = arith.constant 0 : i32
    return %c0_i32, %c0_i32_0 : i32, i32
  }
  func.func @transform_9(%arg0: i32) -> (i32, i32) {
    %c0_i32 = arith.constant 0 : i32
    %c0_i32_0 = arith.constant 0 : i32
    %c0_i32_1 = arith.constant 0 : i32
    return %c0_i32, %c0_i32_0 : i32, i32
  }
  func.func @transform_10(%arg0: i32) -> (i32, i32) {
    %c0_i32 = arith.constant 0 : i32
    %c0_i32_0 = arith.constant 0 : i32
    %c0_i32_1 = arith.constant 0 : i32
    return %c0_i32, %c0_i32_0 : i32, i32
  }
  func.func @transform_11(%arg0: i32) -> (i32, i32) {
    %c0_i32 = arith.constant 0 : i32
    %c0_i32_0 = arith.constant 0 : i32
    %c0_i32_1 = arith.constant 0 : i32
    return %c0_i32, %c0_i32_0 : i32, i32
  }
  func.func @transform_12(%arg0: i32) -> (i32, i32) {
    %c0_i32 = arith.constant 0 : i32
    %c0_i32_0 = arith.constant 0 : i32
    return %arg0, %c0_i32 : i32, i32
  }
}

</mosaic_0001>

<llo_original>
// kernel: tpu_custom_call.1
$region0: #{tpu_custom_call.1}
  #allocation0 [shape = 'u32[]', space=smem, size = 0x4, offset = 0x4, fixed_abs, tag = 'smem constant byte address 0x4 - core index']
  #allocation1 [shape = 'u32[72,128]{1,0:T(1,128)}', space=vmem, size = 0x9000, scoped, tag = 'internal scratch']
  #allocation2 [shape = 'f32[1,1]{1,0:T(1,128)S(1)}', space=vmem, size = 0x200, scoped, tag = 'scoped memory for tpu_custom_call.1']
  %s0 = inlined_call_operand.vmem [shape: f32[16,16], index: 0, kind: input, shape index: {}]
  %s1 = inlined_call_operand.vmem [shape: f32[16,4], index: 1, kind: input, shape index: {}]
  %s2 = inlined_call_operand.hbm [shape: bf16[16,256], index: 2, kind: input, shape index: {}]
  %s3 = inlined_call_operand.vmem [shape: f32[1,256], index: 3, kind: input, shape index: {}]
  %s4 = inlined_call_operand.vmem [shape: bf16[4,128], index: 4, kind: input, shape index: {}]
  %s5 = inlined_call_operand.vmem [shape: f32[1,128], index: 5, kind: input, shape index: {}]
  %s6 = inlined_call_operand.hbm [shape: bf16[256,128], index: 6, kind: input, shape index: {}]
  %s7 = inlined_call_operand.vmem [shape: f32[1,128], index: 7, kind: input, shape index: {}]
  %s8 = inlined_call_operand.hbm [shape: bf16[256,128], index: 8, kind: input, shape index: {}]
  %s9 = inlined_call_operand.vmem [shape: f32[1,128], index: 9, kind: input, shape index: {}]
  %s10 = inlined_call_operand.vmem [shape: f32[1,128], index: 10, kind: input, shape index: {}]
  %s11 = inlined_call_operand.<no memory space> [shape: f32[1,1], index: 11, kind: input, shape index: {}]
  %s12 = inlined_call_operand.vmem [shape: f32[16,1], index: 12, kind: output, shape index: {}]
  %s13 = sld [smem:[#allocation0]]
  $region70: #{tpu_custom_call.1} parent=0
    _
  %s15 = ssub.s32 1, %s13
  %s16 = scalar_select 0, %s15, %s13
  %v17 = vstv %s11
  %18 = vst [vmem:[#allocation2] sm:$0x1] %v17
  $region1: #{tpu_custom_call.1} parent=0
    #allocation3 [shape = 'u8[8192]{0}', space=vmem, size = 0x2000, scoped, tag = 'input window, operand 2, single buffered']
    #allocation4 [shape = 's32[1]{0}', space=sflag, size = 0x4, scoped, tag = 'scoped memory for tpu_custom_call.1']
    #allocation5 [shape = 'u8[65536]{0}', space=vmem, size = 0x10000, scoped, tag = 'input window, operand 6, single buffered']
    #allocation6 [shape = 's32[1]{0}', space=sflag, size = 0x4, scoped, tag = 'scoped memory for tpu_custom_call.1']
    #allocation7 [shape = 'u8[65536]{0}', space=vmem, size = 0x10000, scoped, tag = 'input window, operand 8, single buffered']
    %19 = vsyncpa [#allocation4], 0
    %20 = vsyncpa [#allocation6], 0
    // Predicated region
    $region2: #{tpu_custom_call.1} parent=1 // pred_check
      _
    $region3: #{tpu_custom_call.1} parent=1 // pred_check_branch
      %22 = sbr.rel (0) target = $region5
    $region4: #{tpu_custom_call.1} parent=1 // pred_region
      _
    $region5: #{tpu_custom_call.1} parent=1 // pred_fallthru
      _
    // Predicated region
    $region6: #{tpu_custom_call.1} parent=1 // pred_check
      _
    $region7: #{tpu_custom_call.1} parent=1 // pred_check_branch
      %24 = sbr.rel (0) target = $region9
    $region8: #{tpu_custom_call.1} parent=1 // pred_region
      _
    $region9: #{tpu_custom_call.1} parent=1 // pred_fallthru
      _
    // Predicated region
    $region10: #{tpu_custom_call.1} parent=1 // pred_check
      _
    $region11: #{tpu_custom_call.1} parent=1 // pred_check_branch
      %26 = sbr.rel (0) target = $region13
    $region12: #{tpu_custom_call.1} parent=1 // pred_region
      %28 = vsyncadd [#allocation4], 0
      %s29 = sshll.u32 %s2, 4
      %s30 = int_to_ptr.hbm [resolvable:$true] %s29
      %s31 = sshll.u32 [#allocation3], 4
      %s32 = int_to_ptr.vmem [resolvable:$true] %s31
      %37 = dma.hbm_to_vmem [thread:$0]  %s30, 256, %s32, [#allocation4], 128, 128, 8
    $region13: #{tpu_custom_call.1} parent=1 // pred_fallthru
      _
    // Predicated region
    $region14: #{tpu_custom_call.1} parent=1 // pred_check
      _
    $region15: #{tpu_custom_call.1} parent=1 // pred_check_branch
      %39 = sbr.rel (0) target = $region17
    $region16: #{tpu_custom_call.1} parent=1 // pred_region
      _
    $region17: #{tpu_custom_call.1} parent=1 // pred_fallthru
      _
    // Predicated region
    $region18: #{tpu_custom_call.1} parent=1 // pred_check
      _
    $region19: #{tpu_custom_call.1} parent=1 // pred_check_branch
      %41 = sbr.rel (0) target = $region21
    $region20: #{tpu_custom_call.1} parent=1 // pred_region
      _
    $region21: #{tpu_custom_call.1} parent=1 // pred_fallthru
      _
    // Predicated region
    $region22: #{tpu_custom_call.1} parent=1 // pred_check
      _
    $region23: #{tpu_custom_call.1} parent=1 // pred_check_branch
      %43 = sbr.rel (0) target = $region25
    $region24: #{tpu_custom_call.1} parent=1 // pred_region
      _
    $region25: #{tpu_custom_call.1} parent=1 // pred_fallthru
      _
    // Predicated region
    $region26: #{tpu_custom_call.1} parent=1 // pred_check
      _
    $region27: #{tpu_custom_call.1} parent=1 // pred_check_branch
      %45 = sbr.rel (0) target = $region29
    $region28: #{tpu_custom_call.1} parent=1 // pred_region
      %47 = vsyncadd [#allocation6], 0
      %s48 = sshll.u32 %s6, 4
      %s49 = int_to_ptr.hbm [resolvable:$true] %s48
      %s50 = sshll.u32 [#allocation5], 4
      %s51 = int_to_ptr.vmem [resolvable:$true] %s50
      %56 = dma.hbm_to_vmem [thread:$0]  %s49, 2048, %s51, [#allocation6], 64, 64, 4
    $region29: #{tpu_custom_call.1} parent=1 // pred_fallthru
      _
    // Predicated region
    $region30: #{tpu_custom_call.1} parent=1 // pred_check
      _
    $region31: #{tpu_custom_call.1} parent=1 // pred_check_branch
      %58 = sbr.rel (0) target = $region33
    $region32: #{tpu_custom_call.1} parent=1 // pred_region
      _
    $region33: #{tpu_custom_call.1} parent=1 // pred_fallthru
      _
    // Predicated region
    $region34: #{tpu_custom_call.1} parent=1 // pred_check
      _
    $region35: #{tpu_custom_call.1} parent=1 // pred_check_branch
      %60 = sbr.rel (0) target = $region37
    $region36: #{tpu_custom_call.1} parent=1 // pred_region
      %62 = vsyncadd [#allocation6], 0
      %s63 = sshll.u32 %s8, 4
      %s64 = int_to_ptr.hbm [resolvable:$true] %s63
      %s65 = sshll.u32 [#allocation7], 4
      %s66 = int_to_ptr.vmem [resolvable:$true] %s65
      %71 = dma.hbm_to_vmem [thread:$0]  %s64, 2048, %s66, [#allocation6], 64, 64, 4
    $region37: #{tpu_custom_call.1} parent=1 // pred_fallthru
      _
    // Predicated region
    $region38: #{tpu_custom_call.1} parent=1 // pred_check
      _
    $region39: #{tpu_custom_call.1} parent=1 // pred_check_branch
      %73 = sbr.rel (0) target = $region41
    $region40: #{tpu_custom_call.1} parent=1 // pred_region
      _
    $region41: #{tpu_custom_call.1} parent=1 // pred_fallthru
      _
    // Predicated region
    $region42: #{tpu_custom_call.1} parent=1 // pred_check
      _
    $region43: #{tpu_custom_call.1} parent=1 // pred_check_branch
      %75 = sbr.rel (0) target = $region45
    $region44: #{tpu_custom_call.1} parent=1 // pred_region
      _
    $region45: #{tpu_custom_call.1} parent=1 // pred_fallthru
      _
    // Predicated region
    $region46: #{tpu_custom_call.1} parent=1 // pred_check
      _
    $region47: #{tpu_custom_call.1} parent=1 // pred_check_branch
      %77 = sbr.rel (0) target = $region49
    $region48: #{tpu_custom_call.1} parent=1 // pred_region
      _
    $region49: #{tpu_custom_call.1} parent=1 // pred_fallthru
      _
    // Predicated region
    $region50: #{tpu_custom_call.1} parent=1 // pred_check
      _
    $region51: #{tpu_custom_call.1} parent=1 // pred_check_branch
      %79 = sbr.rel (0) target = $region53
    $region52: #{tpu_custom_call.1} parent=1 // pred_region
      %81 = dma.done [#allocation4], 256
    $region53: #{tpu_custom_call.1} parent=1 // pred_fallthru
      _
    // Predicated region
    $region54: #{tpu_custom_call.1} parent=1 // pred_check
      _
    $region55: #{tpu_custom_call.1} parent=1 // pred_check_branch
      %83 = sbr.rel (0) target = $region57
    $region56: #{tpu_custom_call.1} parent=1 // pred_region
      %85 = dma.done [#allocation6], 2048
    $region57: #{tpu_custom_call.1} parent=1 // pred_fallthru
      _
    // Predicated region
    $region58: #{tpu_custom_call.1} parent=1 // pred_check
      _
    $region59: #{tpu_custom_call.1} parent=1 // pred_check_branch
      %87 = sbr.rel (0) target = $region61
    $region60: #{tpu_custom_call.1} parent=1 // pred_region
      %89 = dma.done [#allocation6], 2048
    $region61: #{tpu_custom_call.1} parent=1 // pred_fallthru
      _
    %v91 = vld [vmem:[%s0] sm:$0xff]
    %v92 = vld [vmem:[%s0 + $0x8] sm:$0xff]
    %v93 = vpack.c.bf16 %v92, %v91
    %v94 = vld [vmem:[%s1] sm:$0xff]
    %v95 = vld [vmem:[%s1 + $0x8] sm:$0xff]
    %v96 = vpack.c.bf16 %v95, %v94
    %v97 = vld [vmem:[#allocation3] sm:$0xff]
    %v98 = vld [vmem:[#allocation3 + $0x8] sm:$0xff]
    %v99 = vld [vmem:[%s3] sm:$0x3]
    %v101 = vperm.slane %v99, 0
    %v102 = vperm.slane %v99, 1
    %v107 = vunpack.c.l.b16 %v97
    %v108 = vunpack.c.h.b16 %v97
    %v109 = vunpack.c.l.b16 %v98
    %v110 = vunpack.c.h.b16 %v98
    %v111 = vpack.c.b16 %v109, %v107
    %v112 = vpack.c.b16 %v110, %v108
    %vm115 = vcmask 130048
    %v117 = vsel %vm115, %v93, 0
    %119 = vmatpush.bf16.msra.mxu0 0
    %120 = vmatpush.bf16.msra.mxu0 0
    %121 = vmatpush.bf16.msra.mxu0 0
    %122 = vmatpush.bf16.msra.mxu0 0
    %123 = vmatpush.bf16.msra.mxu0 0
    %124 = vmatpush.bf16.msra.mxu0 0
    %125 = vmatpush.bf16.msra.mxu0 0
    %126 = vmatpush.bf16.msra.mxu0 %v111
    %127 = vmatmul.bf16.gmra.mxu0 %v117
    %v128 = vpop.f32.mrf.mxu0
    %v129 = vadd.f32 %v101, %v128
    %v130 = vpop.f32.mrf.mxu0
    %v131 = vadd.f32 %v101, %v130
    %132 = vdwg.mxu0
    %133 = vmatpush.bf16.msra.mxu0 0
    %134 = vmatpush.bf16.msra.mxu0 0
    %135 = vmatpush.bf16.msra.mxu0 0
    %136 = vmatpush.bf16.msra.mxu0 0
    %137 = vmatpush.bf16.msra.mxu0 0
    %138 = vmatpush.bf16.msra.mxu0 0
    %139 = vmatpush.bf16.msra.mxu0 0
    %140 = vmatpush.bf16.msra.mxu0 %v112
    %141 = vmatmul.bf16.gmra.mxu0 %v117
    %v142 = vpop.f32.mrf.mxu0
    %v143 = vadd.f32 %v102, %v142
    %v144 = vpop.f32.mrf.mxu0
    %v145 = vadd.f32 %v102, %v144
    %146 = vdwg.mxu0
    %v147 = vmax.f32 %v129, 0.0
    %v148 = vmax.f32 %v143, 0.0
    %v149 = vmax.f32 %v131, 0.0
    %v150 = vmax.f32 %v145, 0.0
    %v151 = vld [vmem:[%s4] sm:$0x3]
    %v152 = vld [vmem:[%s5] sm:$0x1]
    %v154 = vperm.slane %v152, 0
    %vm156 = vcmask 31744
    %v158 = vsel %vm156, %v96, 0
    %vm160 = vcmask 1041408
    %v162 = vsel %vm160, %v151, 0
    %164 = vmatpush.bf16.msra.mxu0 0
    %165 = vmatpush.bf16.msra.mxu0 0
    %166 = vmatpush.bf16.msra.mxu0 0
    %167 = vmatpush.bf16.msra.mxu0 0
    %168 = vmatpush.bf16.msra.mxu0 0
    %169 = vmatpush.bf16.msra.mxu0 0
    %170 = vmatpush.bf16.msra.mxu0 0
    %171 = vmatpush.bf16.msra.mxu0 %v162
    %172 = vmatmul.bf16.gmra.mxu0 %v158
    %v173 = vpop.f32.mrf.mxu0
    %v174 = vadd.f32 %v154, %v173
    %v175 = vpop.f32.mrf.mxu0
    %v176 = vadd.f32 %v154, %v175
    %177 = vdwg.mxu0
    %v178 = vmax.f32 %v174, 0.0
    %v179 = vmax.f32 %v176, 0.0
    %v180 = vpack.c.bf16 %v149, %v147
    %v181 = vpack.c.bf16 %v150, %v148
    %v182 = vld [vmem:[#allocation5] sm:$0xf]
    %v183 = vld [vmem:[#allocation5 + $0x4] sm:$0xf]
    %v184 = vld [vmem:[#allocation5 + $0x8] sm:$0xf]
    %v185 = vld [vmem:[#allocation5 + $0xc] sm:$0xf]
    %v186 = vld [vmem:[#allocation5 + $0x10] sm:$0xf]
    %v187 = vld [vmem:[#allocation5 + $0x14] sm:$0xf]
    %v188 = vld [vmem:[#allocation5 + $0x18] sm:$0xf]
    %v189 = vld [vmem:[#allocation5 + $0x1c] sm:$0xf]
    %v190 = vld [vmem:[#allocation5 + $0x20] sm:$0xf]
    %v191 = vld [vmem:[#allocation5 + $0x24] sm:$0xf]
    %v192 = vld [vmem:[#allocation5 + $0x28] sm:$0xf]
    %v193 = vld [vmem:[#allocation5 + $0x2c] sm:$0xf]
    %v194 = vld [vmem:[#allocation5 + $0x30] sm:$0xf]
    %v195 = vld [vmem:[#allocation5 + $0x34] sm:$0xf]
    %v196 = vld [vmem:[#allocation5 + $0x38] sm:$0xf]
    %v197 = vld [vmem:[#allocation5 + $0x3c] sm:$0xf]
    %v198 = vld [vmem:[#allocation5 + $0x40] sm:$0xf]
    %v199 = vld [vmem:[#allocation5 + $0x44] sm:$0xf]
    %v200 = vld [vmem:[#allocation5 + $0x48] sm:$0xf]
    %v201 = vld [vmem:[#allocation5 + $0x4c] sm:$0xf]
    %v202 = vld [vmem:[#allocation5 + $0x50] sm:$0xf]
    %v203 = vld [vmem:[#allocation5 + $0x54] sm:$0xf]
    %v204 = vld [vmem:[#allocation5 + $0x58] sm:$0xf]
    %v205 = vld [vmem:[#allocation5 + $0x5c] sm:$0xf]
    %v206 = vld [vmem:[#allocation5 + $0x60] sm:$0xf]
    %v207 = vld [vmem:[#allocation5 + $0x64] sm:$0xf]
    %v208 = vld [vmem:[#allocation5 + $0x68] sm:$0xf]
    %v209 = vld [vmem:[#allocation5 + $0x6c] sm:$0xf]
    %v210 = vld [vmem:[#allocation5 + $0x70] sm:$0xf]
    %v211 = vld [vmem:[#allocation5 + $0x74] sm:$0xf]
    %v212 = vld [vmem:[#allocation5 + $0x78] sm:$0xf]
    %v213 = vld [vmem:[#allocation5 + $0x7c] sm:$0xf]
    %v214 = vld [vmem:[%s7] sm:$0x1]
    %v216 = vperm.slane %v214, 0
    %v250 = vunpack.c.l.b16 %v182
    %v251 = vunpack.c.l.b16 %v183
    %v252 = vunpack.c.l.b16 %v184
    %v253 = vunpack.c.l.b16 %v185
    %v254 = vunpack.c.l.b16 %v186
    %v255 = vunpack.c.l.b16 %v187
    %v256 = vunpack.c.l.b16 %v188
    %v257 = vunpack.c.l.b16 %v189
    %v258 = vunpack.c.l.b16 %v190
    %v259 = vunpack.c.l.b16 %v191
    %v260 = vunpack.c.l.b16 %v192
    %v261 = vunpack.c.l.b16 %v193
    %v262 = vunpack.c.l.b16 %v194
    %v263 = vunpack.c.l.b16 %v195
    %v264 = vunpack.c.l.b16 %v196
    %v265 = vunpack.c.l.b16 %v197
    %v266 = vunpack.c.l.b16 %v198
    %v267 = vunpack.c.l.b16 %v199
    %v268 = vunpack.c.l.b16 %v200
    %v269 = vunpack.c.l.b16 %v201
    %v270 = vunpack.c.l.b16 %v202
    %v271 = vunpack.c.l.b16 %v203
    %v272 = vunpack.c.l.b16 %v204
    %v273 = vunpack.c.l.b16 %v205
    %v274 = vunpack.c.l.b16 %v206
    %v275 = vunpack.c.l.b16 %v207
    %v276 = vunpack.c.l.b16 %v208
    %v277 = vunpack.c.l.b16 %v209
    %v278 = vunpack.c.l.b16 %v210
    %v279 = vunpack.c.l.b16 %v211
    %v280 = vunpack.c.l.b16 %v212
    %v281 = vunpack.c.l.b16 %v213
    %v282 = vpack.c.b16 %v251, %v250
    %v283 = vpack.c.b16 %v253, %v252
    %v284 = vpack.c.b16 %v255, %v254
    %v285 = vpack.c.b16 %v257, %v256
    %v286 = vpack.c.b16 %v259, %v258
    %v287 = vpack.c.b16 %v261, %v260
    %v288 = vpack.c.b16 %v263, %v262
    %v289 = vpack.c.b16 %v265, %v264
    %v290 = vpack.c.b16 %v267, %v266
    %v291 = vpack.c.b16 %v269, %v268
    %v292 = vpack.c.b16 %v271, %v270
    %v293 = vpack.c.b16 %v273, %v272
    %v294 = vpack.c.b16 %v275, %v274
    %v295 = vpack.c.b16 %v277, %v276
    %v296 = vpack.c.b16 %v279, %v278
    %v297 = vpack.c.b16 %v281, %v280
    %314 = vmatpush.bf16.msra.mxu0 %v289
    %315 = vmatpush.bf16.msra.mxu0 %v288
    %316 = vmatpush.bf16.msra.mxu0 %v287
    %317 = vmatpush.bf16.msra.mxu0 %v286
    %318 = vmatpush.bf16.msra.mxu0 %v285
    %319 = vmatpush.bf16.msra.mxu0 %v284
    %320 = vmatpush.bf16.msra.mxu0 %v283
    %321 = vmatpush.bf16.msra.mxu0 %v282
    %322 = vmatmul.bf16.gmra.mxu0 %v180
    %v323 = vpop.f32.mrf.mxu0
    %v324 = vadd.f32 %v216, %v323
    %v325 = vpop.f32.mrf.mxu0
    %v326 = vadd.f32 %v216, %v325
    %327 = vdwg.mxu0
    %328 = vmatpush.bf16.msra.mxu0 %v297
    %329 = vmatpush.bf16.msra.mxu0 %v296
    %330 = vmatpush.bf16.msra.mxu0 %v295
    %331 = vmatpush.bf16.msra.mxu0 %v294
    %332 = vmatpush.bf16.msra.mxu0 %v293
    %333 = vmatpush.bf16.msra.mxu0 %v292
    %334 = vmatpush.bf16.msra.mxu0 %v291
    %335 = vmatpush.bf16.msra.mxu0 %v290
    %336 = vmatmul.bf16.gmra.mxu0 %v181
    %v337 = vpop.f32.mrf.mxu0
    %v338 = vadd.f32 %v324, %v337
    %v339 = vpop.f32.mrf.mxu0
    %v340 = vadd.f32 %v326, %v339
    %341 = vdwg.mxu0
    %v342 = vmax.f32 %v338, 0.0
    %v343 = vmax.f32 %v340, 0.0
    %v344 = vpack.c.bf16 %v342, %v342
    %v345 = vpack.c.bf16 %v343, %v343
    %v346 = vpack.c.bf16 %v178, %v178
    %v347 = vpack.c.bf16 %v179, %v179
    %v350 = vunpack.c.l.b16 %v344
    %v351 = vunpack.c.l.b16 %v345
    %v352 = vpack.c.b16 %v351, %v350
    %v356 = vunpack.c.l.b16 %v346
    %v357 = vunpack.c.l.b16 %v347
    %v358 = vpack.c.b16 %v357, %v356
    %v360 = vld [vmem:[#allocation7] sm:$0xf]
    %v361 = vld [vmem:[#allocation7 + $0x4] sm:$0xf]
    %v362 = vld [vmem:[#allocation7 + $0x8] sm:$0xf]
    %v363 = vld [vmem:[#allocation7 + $0xc] sm:$0xf]
    %v364 = vld [vmem:[#allocation7 + $0x10] sm:$0xf]
    %v365 = vld [vmem:[#allocation7 + $0x14] sm:$0xf]
    %v366 = vld [vmem:[#allocation7 + $0x18] sm:$0xf]
    %v367 = vld [vmem:[#allocation7 + $0x1c] sm:$0xf]
    %v368 = vld [vmem:[#allocation7 + $0x20] sm:$0xf]
    %v369 = vld [vmem:[#allocation7 + $0x24] sm:$0xf]
    %v370 = vld [vmem:[#allocation7 + $0x28] sm:$0xf]
    %v371 = vld [vmem:[#allocation7 + $0x2c] sm:$0xf]
    %v372 = vld [vmem:[#allocation7 + $0x30] sm:$0xf]
    %v373 = vld [vmem:[#allocation7 + $0x34] sm:$0xf]
    %v374 = vld [vmem:[#allocation7 + $0x38] sm:$0xf]
    %v375 = vld [vmem:[#allocation7 + $0x3c] sm:$0xf]
    %v376 = vld [vmem:[#allocation7 + $0x40] sm:$0xf]
    %v377 = vld [vmem:[#allocation7 + $0x44] sm:$0xf]
    %v378 = vld [vmem:[#allocation7 + $0x48] sm:$0xf]
    %v379 = vld [vmem:[#allocation7 + $0x4c] sm:$0xf]
    %v380 = vld [vmem:[#allocation7 + $0x50] sm:$0xf]
    %v381 = vld [vmem:[#allocation7 + $0x54] sm:$0xf]
    %v382 = vld [vmem:[#allocation7 + $0x58] sm:$0xf]
    %v383 = vld [vmem:[#allocation7 + $0x5c] sm:$0xf]
    %v384 = vld [vmem:[#allocation7 + $0x60] sm:$0xf]
    %v385 = vld [vmem:[#allocation7 + $0x64] sm:$0xf]
    %v386 = vld [vmem:[#allocation7 + $0x68] sm:$0xf]
    %v387 = vld [vmem:[#allocation7 + $0x6c] sm:$0xf]
    %v388 = vld [vmem:[#allocation7 + $0x70] sm:$0xf]
    %v389 = vld [vmem:[#allocation7 + $0x74] sm:$0xf]
    %v390 = vld [vmem:[#allocation7 + $0x78] sm:$0xf]
    %v391 = vld [vmem:[#allocation7 + $0x7c] sm:$0xf]
    %v392 = vld [vmem:[%s9] sm:$0x1]
    %v394 = vperm.slane %v392, 0
    %v428 = vunpack.c.l.b16 %v360
    %v429 = vunpack.c.l.b16 %v361
    %v430 = vunpack.c.l.b16 %v362
    %v431 = vunpack.c.l.b16 %v363
    %v432 = vunpack.c.l.b16 %v364
    %v433 = vunpack.c.l.b16 %v365
    %v434 = vunpack.c.l.b16 %v366
    %v435 = vunpack.c.l.b16 %v367
    %v436 = vunpack.c.l.b16 %v368
    %v437 = vunpack.c.l.b16 %v369
    %v438 = vunpack.c.l.b16 %v370
    %v439 = vunpack.c.l.b16 %v371
    %v440 = vunpack.c.l.b16 %v372
    %v441 = vunpack.c.l.b16 %v373
    %v442 = vunpack.c.l.b16 %v374
    %v443 = vunpack.c.l.b16 %v375
    %v444 = vunpack.c.l.b16 %v376
    %v445 = vunpack.c.l.b16 %v377
    %v446 = vunpack.c.l.b16 %v378
    %v447 = vunpack.c.l.b16 %v379
    %v448 = vunpack.c.l.b16 %v380
    %v449 = vunpack.c.l.b16 %v381
    %v450 = vunpack.c.l.b16 %v382
    %v451 = vunpack.c.l.b16 %v383
    %v452 = vunpack.c.l.b16 %v384
    %v453 = vunpack.c.l.b16 %v385
    %v454 = vunpack.c.l.b16 %v386
    %v455 = vunpack.c.l.b16 %v387
    %v456 = vunpack.c.l.b16 %v388
    %v457 = vunpack.c.l.b16 %v389
    %v458 = vunpack.c.l.b16 %v390
    %v459 = vunpack.c.l.b16 %v391
    %v460 = vpack.c.b16 %v429, %v428
    %v461 = vpack.c.b16 %v431, %v430
    %v462 = vpack.c.b16 %v433, %v432
    %v463 = vpack.c.b16 %v435, %v434
    %v464 = vpack.c.b16 %v437, %v436
    %v465 = vpack.c.b16 %v439, %v438
    %v466 = vpack.c.b16 %v441, %v440
    %v467 = vpack.c.b16 %v443, %v442
    %v468 = vpack.c.b16 %v445, %v444
    %v469 = vpack.c.b16 %v447, %v446
    %v470 = vpack.c.b16 %v449, %v448
    %v471 = vpack.c.b16 %v451, %v450
    %v472 = vpack.c.b16 %v453, %v452
    %v473 = vpack.c.b16 %v455, %v454
    %v474 = vpack.c.b16 %v457, %v456
    %v475 = vpack.c.b16 %v459, %v458
    %492 = vmatpush.bf16.msra.mxu0 %v467
    %493 = vmatpush.bf16.msra.mxu0 %v466
    %494 = vmatpush.bf16.msra.mxu0 %v465
    %495 = vmatpush.bf16.msra.mxu0 %v464
    %496 = vmatpush.bf16.msra.mxu0 %v463
    %497 = vmatpush.bf16.msra.mxu0 %v462
    %498 = vmatpush.bf16.msra.mxu0 %v461
    %499 = vmatpush.bf16.msra.mxu0 %v460
    %500 = vmatmul.bf16.gmra.mxu0 %v352
    %v501 = vpop.f32.mrf.mxu0
    %v502 = vadd.f32 %v394, %v501
    %v503 = vpop.f32.mrf.mxu0
    %v504 = vadd.f32 %v394, %v503
    %505 = vdwg.mxu0
    %506 = vmatpush.bf16.msra.mxu0 %v475
    %507 = vmatpush.bf16.msra.mxu0 %v474
    %508 = vmatpush.bf16.msra.mxu0 %v473
    %509 = vmatpush.bf16.msra.mxu0 %v472
    %510 = vmatpush.bf16.msra.mxu0 %v471
    %511 = vmatpush.bf16.msra.mxu0 %v470
    %512 = vmatpush.bf16.msra.mxu0 %v469
    %513 = vmatpush.bf16.msra.mxu0 %v468
    %514 = vmatmul.bf16.gmra.mxu0 %v358
    %v515 = vpop.f32.mrf.mxu0
    %v516 = vadd.f32 %v502, %v515
    %v517 = vpop.f32.mrf.mxu0
    %v518 = vadd.f32 %v504, %v517
    %519 = vdwg.mxu0
    %v520 = vmax.f32 %v516, 0.0
    %v521 = vmax.f32 %v518, 0.0
    %v522 = vld [vmem:[%s10] sm:$0x1]
    %v524 = vperm.slane %v522, 0
    %v526 = vmul.f32 %v520, %v524
    %v527 = vmul.f32 %v521, %v524
    %528 = vadd.xlane.f32.xlu0 %v526
    %v529 = vpop.xlane.xlu0 %528
    %530 = vadd.xlane.f32.xlu0 %v527
    %v531 = vpop.xlane.xlu0 %530
    %v532 = vld [vmem:[#allocation2] sm:$0x1]
    %v534 = vperm.slane %v532, 0
    %v536 = vadd.f32 %v529, %v534
    %v537 = vadd.f32 %v531, %v534
    %vm538 = vcmask 7168
    %539 = vst.msk [vmem:[%s12] sm:$0xff] %vm538, %v536
    %540 = vst.msk [vmem:[%s12 + $0x8] sm:$0xff] %vm538, %v537
    // Predicated region
    $region62: #{tpu_custom_call.1} parent=1 // pred_check
      _
    $region63: #{tpu_custom_call.1} parent=1 // pred_check_branch
      %542 = sbr.rel (0) target = $region65
    $region64: #{tpu_custom_call.1} parent=1 // pred_region
      _
    $region65: #{tpu_custom_call.1} parent=1 // pred_fallthru
      _
    // Predicated region
    $region66: #{tpu_custom_call.1} parent=1 // pred_check
      _
    $region67: #{tpu_custom_call.1} parent=1 // pred_check_branch
      %544 = sbr.rel (0) target = $region69
    $region68: #{tpu_custom_call.1} parent=1 // pred_region
      _
    $region69: #{tpu_custom_call.1} parent=1 // pred_fallthru
      _
    %545 = vsyncpa [#allocation4], 1
    %546 = vsyncpa [#allocation6], 1

</llo_original>
